<compile_context>
chip_gen: v6e
topology: v6e:2x2x1
jax: 0.10.0
libtpu: 0.0.40
codegen_flags: <defaults>
</compile_context>

<pallas_src>
import jax
import jax.numpy as jnp
from jax.experimental import pallas as pl
from jax.experimental.pallas import tpu as pltpu


def _round_up(x, m):
    return ((x + m - 1) // m) * m


# ----------------------------------------------------------------------------
# Pallas kernel: exact embedding gather via a pipelined per-row DMA gather.
#   ids_ref   : SMEM (n_ids,) int32  -- scalar-prefetched token ids (full array)
#   table_hbm : ANY/HBM (V, D_pad)   -- embedding table, left in place
#   out_ref   : VMEM (TILE, D_pad)   -- output slab for this grid step
#   copy_sems : DMA semaphores, NSEM-deep round-robin (NSEM in-flight row DMAs)
# ----------------------------------------------------------------------------
def _embed_gather_kernel(ids_ref, table_hbm, out_ref, copy_sems):
    tile = out_ref.shape[0]
    vocab = table_hbm.shape[0]
    nsem = copy_sems.shape[0]                  # power of two
    base = pl.program_id(0) * tile

    def row_copy(src_row, dst_row, slot):
        return pltpu.make_async_copy(
            table_hbm.at[pl.ds(src_row, 1)],   # (1, D_pad) HBM row
            out_ref.at[pl.ds(dst_row, 1)],     # (1, D_pad) VMEM row
            copy_sems.at[slot])

    def issue(r):
        # Bounds-safe gather address (also covers padded tail ids).
        idx = jnp.clip(ids_ref[base + r], 0, vocab - 1)
        row_copy(idx, r, r & (nsem - 1)).start()

    def drain(r):
        row_copy(0, r, r & (nsem - 1)).wait()

    # Keep up to NSEM row DMAs in flight: wait on a slot only when we are about
    # to reuse it, so scalar address generation overlaps the outstanding DMAs.
    @pl.loop(0, tile)
    def _(r):
        @pl.when(r >= nsem)
        def _():
            drain(r - nsem)
        issue(r)

    # Drain the tail of the pipeline before the output block is written back.
    @pl.loop(max(tile - nsem, 0), tile)
    def _(r):
        drain(r)


# ----------------------------------------------------------------------------
# One-time weight preparation (hoisted out of the per-call path):
# pad the embedding dim to a lane-dense multiple of 128 (e.g. GloVe 300 -> 384).
# Works for f32 or bf16 tables; the gather just streams whatever dtype it gets.
# ----------------------------------------------------------------------------
def prepare_glove_table(table):
    _, d = table.shape
    d_pad = _round_up(d, 128)
    if d_pad != d:
        table = jnp.pad(table, ((0, 0), (0, d_pad - d)))
    return table, d


def _choose_tile(n_rows, max_tile=256):
    """Rows per grid step: multiple of 8, capped, and >= 2 grid steps when
    possible so the "parallel" axis can shard across v7x's two TensorCores."""
    n8 = _round_up(max(n_rows, 8), 8)
    tile = min(max_tile, n8)
    if n8 >= 16:
        tile = min(tile, _round_up(n8 // 2, 8))
    return tile


def glove_embedding_lookup(ids, table_padded, d_orig=None, *, max_tile=256):
    """out[b, s, :] = table[ids[b, s], :]  (bit-exact nn.Embedding forward)."""
    B, S = ids.shape
    vocab, d_pad = table_padded.shape
    if d_orig is None:
        d_orig = d_pad
    n = B * S

    tile = _choose_tile(n, max_tile)
    grid = pl.cdiv(n, tile)            # partial last block: no output row padding
    n_ids = grid * tile                # ids padded so SMEM reads stay in bounds

    flat = ids.reshape(n).astype(jnp.int32)
    if n_ids != n:
        flat = jnp.pad(flat, (0, n_ids - n))

    nsem = min(tile, 16)               # in-flight row DMAs per grid step
    assert nsem & (nsem - 1) == 0, nsem

    itemsize = jnp.dtype(table_padded.dtype).itemsize
    # Double-buffered output block + headroom; table never enters VMEM.
    vmem_limit = int(min(64 << 20,
                         max(4 << 20, 2 * tile * d_pad * itemsize + (2 << 20))))

    out = pl.pallas_call(
        _embed_gather_kernel,
        out_shape=jax.ShapeDtypeStruct((n, d_pad), table_padded.dtype),
        grid_spec=pltpu.PrefetchScalarGridSpec(
            num_scalar_prefetch=1,                          # ids -> SMEM
            grid=(grid,),
            in_specs=[pl.BlockSpec(memory_space=pl.ANY)],   # table stays in HBM
            out_specs=pl.BlockSpec((tile, d_pad), lambda i, ids: (i, 0)),
            scratch_shapes=[pltpu.SemaphoreType.DMA((nsem,))],
        ),
        compiler_params=pltpu.CompilerParams(
            dimension_semantics=("parallel",),
            vmem_limit_bytes=vmem_limit),
        cost_estimate=pl.CostEstimate(
            flops=0,
            transcendentals=0,
            bytes_accessed=2 * n * d_pad * itemsize + n_ids * 4),
    )(flat, table_padded)

    if d_pad != d_orig:
        # TODO(synk): downstream TransformerModel/CNN matmuls could consume the
        #             lane-padded D directly and avoid this extra HBM pass.
        out = out[:, :d_orig]
    return out.reshape(B, S, d_orig)


# ----------------------------------------------------------------------------
# Host-side glue mirroring get_embedding.get_glove():
#   word2id lookup + pad-to-max-len with (vocab_size - 1), then kernel gather.
# ----------------------------------------------------------------------------
def get_embedding_forward(sentence_lists, word2id, table_padded, d_orig):
    vocab_size = table_padded.shape[0]
    max_len = max(len(s) for s in sentence_lists)
    id_lists = [[word2id.get(w, 0) for w in s] for s in sentence_lists]
    id_lists = [s + [vocab_size - 1] * (max_len - len(s)) for s in id_lists]
    ids = jnp.asarray(id_lists, dtype=jnp.int32)
    return glove_embedding_lookup(ids, table_padded, d_orig)


if __name__ == "__main__":
    # Small synthetic config consistent with the module:
    #   vocab_size = 64, glove_dim = 128, batch = 2, ragged sentences -> seq = 8
    VOCAB = 64
    DIM = 128

    key = jax.random.PRNGKey(0)
    k_tab, _ = jax.random.split(key)

    # Deterministic synthetic "GloVe" table (stands in for the .npy checkpoint).
    glove_table = jax.random.normal(k_tab, (VOCAB, DIM), dtype=jnp.float32)

    # One-time weight prep (D padding hoisted out of the per-call path).
    table_padded, d_orig = prepare_glove_table(glove_table)

    # Synthetic vocabulary and ragged sentences (second is shorter -> padded
    # with id VOCAB-1, exactly like the torch module).
    word2id = {f"w{i}": i for i in range(VOCAB)}
    sentences = [
        ["w3", "w17", "w5", "w42", "w0", "w9", "w13", "w7"],   # len 8
        ["w1", "w2", "w8", "w31", "w63"],                      # len 5 -> padded
    ]

    out = get_embedding_forward(sentences, word2id, table_padded, d_orig)
    out = jax.block_until_ready(out)

    # Reference: plain JAX embedding gather with identical padding semantics.
    max_len = max(len(s) for s in sentences)
    ref_ids = jnp.asarray(
        [[word2id.get(w, 0) for w in s] + [VOCAB - 1] * (max_len - len(s))
         for s in sentences], dtype=jnp.int32)
    ref = glove_table[ref_ids]

    assert out.shape == (2, 8, DIM), out.shape
    assert out.dtype == jnp.float32
    # The DMA gather returns table rows verbatim -> bit-exact equality.
    assert bool(jnp.array_equal(out, ref)), float(jnp.max(jnp.abs(out - ref)))

    print("KERNEL_OK")
</pallas_src>

<mosaic_0001>
module attributes {stable_mosaic.version = 11 : i64} {
  func.func @_embed_gather_kernel(%arg0: i32, %arg1: memref<16xi32, #tpu.memory_space<smem>>, %arg2: memref<64x128xf32, #tpu.memory_space<any>>, %arg3: memref<8x128xf32, #tpu.memory_space<vmem>>, %arg4: memref<8x!tpu.dma_semaphore, #tpu.memory_space<semaphore_mem>>) attributes {dimension_semantics = [#tpu.dimension_semantics<parallel>], iteration_bounds = array<i64: 2>, scalar_prefetch = 1 : i64, scratch_operands = 1 : i64, tpu.core_type = #tpu.core_type<tc>, window_params = [{}, {transform_indices = @transform_1, window_bounds = array<i64: 8, 128>}]} {
    %c8_i32 = arith.constant 8 : i32
    %0 = arith.muli %arg0, %c8_i32 : i32
    %c0_i32 = arith.constant 0 : i32
    %c8_i32_0 = arith.constant 8 : i32
    %1 = arith.addi %c0_i32, %c8_i32_0 : i32
    %c1_i32 = arith.constant 1 : i32
    scf.for %arg5 = %c0_i32 to %1 step %c1_i32  : i32 {
      %c1_i32_6 = arith.constant 1 : i32
      %3 = arith.muli %arg5, %c1_i32_6 : i32
      %c0_i32_7 = arith.constant 0 : i32
      %4 = arith.addi %c0_i32_7, %3 : i32
      %c8_i32_8 = arith.constant 8 : i32
      %5 = arith.cmpi sge, %4, %c8_i32_8 : i32
      %6 = arith.extui %5 : i1 to i32
      %c0_i32_9 = arith.constant 0 : i32
      %7 = arith.cmpi ne, %6, %c0_i32_9 : i32
      scf.if %7 {
        %c8_i32_13 = arith.constant 8 : i32
        %18 = arith.subi %4, %c8_i32_13 : i32
        %c7_i32_14 = arith.constant 7 : i32
        %19 = arith.andi %18, %c7_i32_14 : i32
        %c0_i32_15 = arith.constant 0 : i32
        %c0_i32_16 = arith.constant 0 : i32
        %20 = tpu.memref_slice %arg2[%c0_i32_15, %c0_i32_16] : memref<64x128xf32, #tpu.memory_space<any>> -> memref<1x128xf32, #tpu.memory_space<any>>
        %c0_i32_17 = arith.constant 0 : i32
        %21 = tpu.memref_slice %arg3[%18, %c0_i32_17] : memref<8x128xf32, #tpu.memory_space<vmem>> -> memref<1x128xf32, #tpu.memory_space<vmem>>
        %22 = tpu.memref_slice %arg4[%19] : memref<8x!tpu.dma_semaphore, #tpu.memory_space<semaphore_mem>> -> memref<1x!tpu.dma_semaphore, #tpu.memory_space<semaphore_mem>>
        %23 = tpu.memref_squeeze %22 : memref<1x!tpu.dma_semaphore, #tpu.memory_space<semaphore_mem>> -> memref<!tpu.dma_semaphore, #tpu.memory_space<semaphore_mem>>
        tpu.wait_dma2 semaphore(%23 : memref<!tpu.dma_semaphore, #tpu.memory_space<semaphore_mem>>) src(%20 : memref<1x128xf32, #tpu.memory_space<any>>) dst(%21 : memref<1x128xf32, #tpu.memory_space<vmem>>)
      } else {
      }
      %8 = arith.addi %0, %4 : i32
      %9 = arith.index_cast %8 : i32 to index
      %10 = memref.load %arg1[%9] : memref<16xi32, #tpu.memory_space<smem>>
      %c0_i32_10 = arith.constant 0 : i32
      %c63_i32 = arith.constant 63 : i32
      %11 = arith.maxsi %c0_i32_10, %10 : i32
      %12 = arith.minsi %c63_i32, %11 : i32
      %c7_i32 = arith.constant 7 : i32
      %13 = arith.andi %4, %c7_i32 : i32
      %c0_i32_11 = arith.constant 0 : i32
      %14 = tpu.memref_slice %arg2[%12, %c0_i32_11] : memref<64x128xf32, #tpu.memory_space<any>> -> memref<1x128xf32, #tpu.memory_space<any>>
      %c0_i32_12 = arith.constant 0 : i32
      %15 = tpu.memref_slice %arg3[%4, %c0_i32_12] : memref<8x128xf32, #tpu.memory_space<vmem>> -> memref<1x128xf32, #tpu.memory_space<vmem>>
      %16 = tpu.memref_slice %arg4[%13] : memref<8x!tpu.dma_semaphore, #tpu.memory_space<semaphore_mem>> -> memref<1x!tpu.dma_semaphore, #tpu.memory_space<semaphore_mem>>
      %17 = tpu.memref_squeeze %16 : memref<1x!tpu.dma_semaphore, #tpu.memory_space<semaphore_mem>> -> memref<!tpu.dma_semaphore, #tpu.memory_space<semaphore_mem>>
      tpu.enqueue_dma source(%14 : memref<1x128xf32, #tpu.memory_space<any>>) target(%15 : memref<1x128xf32, #tpu.memory_space<vmem>>) target_semaphore(%17 : memref<!tpu.dma_semaphore, #tpu.memory_space<semaphore_mem>>)
    }
    %c8_i32_1 = arith.constant 8 : i32
    %c0_i32_2 = arith.constant 0 : i32
    %c8_i32_3 = arith.constant 8 : i32
    %2 = arith.addi %c0_i32_2, %c8_i32_3 : i32
    %c1_i32_4 = arith.constant 1 : i32
    scf.for %arg5 = %c0_i32_2 to %2 step %c1_i32_4  : i32 {
      %c1_i32_6 = arith.constant 1 : i32
      %3 = arith.muli %arg5, %c1_i32_6 : i32
      %c0_i32_7 = arith.constant 0 : i32
      %4 = arith.addi %c0_i32_7, %3 : i32
      %c7_i32 = arith.constant 7 : i32
      %5 = arith.andi %4, %c7_i32 : i32
      %c0_i32_8 = arith.constant 0 : i32
      %c0_i32_9 = arith.constant 0 : i32
      %6 = tpu.memref_slice %arg2[%c0_i32_8, %c0_i32_9] : memref<64x128xf32, #tpu.memory_space<any>> -> memref<1x128xf32, #tpu.memory_space<any>>
      %c0_i32_10 = arith.constant 0 : i32
      %7 = tpu.memref_slice %arg3[%4, %c0_i32_10] : memref<8x128xf32, #tpu.memory_space<vmem>> -> memref<1x128xf32, #tpu.memory_space<vmem>>
      %8 = tpu.memref_slice %arg4[%5] : memref<8x!tpu.dma_semaphore, #tpu.memory_space<semaphore_mem>> -> memref<1x!tpu.dma_semaphore, #tpu.memory_space<semaphore_mem>>
      %9 = tpu.memref_squeeze %8 : memref<1x!tpu.dma_semaphore, #tpu.memory_space<semaphore_mem>> -> memref<!tpu.dma_semaphore, #tpu.memory_space<semaphore_mem>>
      tpu.wait_dma2 semaphore(%9 : memref<!tpu.dma_semaphore, #tpu.memory_space<semaphore_mem>>) src(%6 : memref<1x128xf32, #tpu.memory_space<any>>) dst(%7 : memref<1x128xf32, #tpu.memory_space<vmem>>)
    }
    %c8_i32_5 = arith.constant 8 : i32
    return
  }
  func.func @transform_1(%arg0: i32, %arg1: memref<16xi32, #tpu.memory_space<smem>>) -> (i32, i32) {
    %c0_i32 = arith.constant 0 : i32
    %c0_i32_0 = arith.constant 0 : i32
    return %arg0, %c0_i32 : i32, i32
  }
}

</mosaic_0001>

<llo_original>
// kernel: tpu_custom_call.1
$region0: #{tpu_custom_call.1}
  #allocation0 [shape = 'u32[]', space=smem, size = 0x4, offset = 0x4, fixed_abs, tag = 'smem constant byte address 0x4 - core index']
  #allocation1 [shape = 'u32[144,128]{1,0:T(1,128)}', space=vmem, size = 0x12000, scoped, tag = 'internal scratch']
  #allocation2 [shape = 's32[8]{0}', space=sflag, size = 0x20, scoped, tag = 'scratch operand']
  #allocation3 [shape = 's32[1]{0}', space=sflag, size = 0x4, scoped, tag = 'scoped memory for tpu_custom_call.1']
  #allocation4 [shape = 'u8[512]{0}', space=smem, size = 0x200, scoped, tag = 'prefetched SMEM operand 0']
  #allocation7 [shape = 's32[]', space=sflag, size = 0x4, offset = 0, fixed_abs, tag = 'sflag constant byte address 0x0 - dummy sync flag']
  #allocation8 [shape = 's32[]', space=sflag, size = 0x4, offset = 0, fixed_abs, tag = 'sflag constant byte address 0x0 - dummy sync flag']
  #allocation9 [shape = 'u32[]', space=smem, size = 0x4, offset = 0x44, fixed_abs, tag = 'smem constant byte address 0x44 - assertion arg 0']
  #allocation10 [shape = 'u32[]', space=smem, size = 0x4, offset = 0x48, fixed_abs, tag = 'smem constant byte address 0x48 - assertion arg 1']
  %s0 = inlined_call_operand.hbm [shape: s32[16], index: 0, kind: input, shape index: {}]
  %s1 = inlined_call_operand.hbm [shape: f32[64,128], index: 1, kind: input, shape index: {}]
  %s2 = inlined_call_operand.hbm [shape: f32[16,128], index: 2, kind: output, shape index: {}]
  %s3 = sld [smem:[#allocation0]]
  $region47: #{tpu_custom_call.1} parent=0
    _
  %s5 = ssub.s32 1, %s3
  %s6 = scalar_select 0, %s5, %s3
  %8 = dma.hbm_to_smem %s0, 16, [#allocation4], [#allocation3]
  %9 = dma.done [#allocation3], 16
  %10 = sfence
  $region1: #{tpu_custom_call.1} parent=0
    #allocation5 [shape = 'u8[8192]{0}', space=vmem, size = 0x2000, scoped, tag = 'output window, operand 0']
    #allocation6 [shape = 's32[2]{0}', space=sflag, size = 0x8, scoped, tag = 'scoped memory for tpu_custom_call.1']
    %11 = vsyncpa [#allocation6], 0
    %s12 = scalar_lea.sflag [#allocation6], 1
    %13 = vsyncpa %s12, 0
    loop: start=0, step=1, limit=3
    $region2: #{tpu_custom_call.1} parent=1 // loop_pre_header
      _
    $region3: #{tpu_custom_call.1} parent=1 // loop_header
      %s15 = sphi 0, %s19
      %p16 = scmp.ge.s32.totalorder %s15, 3
      %s24 = sphi 0, %s26
      %s27 = sphi 0, %s24
      %s37 = sphi 0, %s27
    $region4: #{tpu_custom_call.1} parent=1 // loop_header_branch
      %18 = sbr.rel (%p16) target = $region8
    $region5: #{tpu_custom_call.1} parent=1 // loop_body
      %s20 = ssub.s32 %s15, 1
      %s21 = sadd.s32 %s15, 1
      %s22 = ssub.s32 %s15, %s21
      %p23 = scmp.eq.s32.totalorder %s22, 0
      %s25 = sadd.s32 %s24, 1
      %s26 = scalar_select %p23, %s24, %s25
      %p28 = pneg %p23
      %p29 = scmp.eq.s32.totalorder %s15, 1
      %p30 = por %p28, %p29
      %p31 = scmp.ne.s32.totalorder %s24, %s27
      %p32 = scmp.eq.s32.totalorder %s15, 0
      %p33 = por %p31, %p32
      %p34 = scmp.ne.s32.totalorder %s24, %s27
      %p35 = scmp.eq.s32.totalorder %s20, 1
      %p36 = por %p34, %p35
      %p38 = scmp.ne.s32.totalorder %s27, %s37
      %p39 = scmp.eq.s32.totalorder %s20, 0
      %p40 = por %p38, %p39
      %p41 = scmp.lt.s32.totalorder %s15, 2
      // Predicated region
      $region9: #{tpu_custom_call.1} parent=5 // pred_check
        %p42 = pneg %p41
      $region10: #{tpu_custom_call.1} parent=5 // pred_check_branch
        %44 = sbr.rel (%p42) target = $region12
      $region11: #{tpu_custom_call.1} parent=5 // pred_region
        %p45 = pneg %p33
        %p46 = pneg %p30
        %s47 = sand.u32 %s24, 1
        %s48 = scalar_lea.sflag [#allocation6], %s47
        %s49 = sand.u32 %s24, 1
        %s50 = smul.addr %s49, 8
        %s51 = scalar_lea.vmem [#allocation5], %s50
        %s52 = smul.u32 %s15, 8
        loop: start=0, step=1, limit=8
        $region13: #{tpu_custom_call.1} parent=11 // loop_pre_header
          _
        $region14: #{tpu_custom_call.1} parent=11 // loop_header
          %s54 = sphi 0, %s58
          %p55 = scmp.ge.s32.totalorder %s54, 8
        $region15: #{tpu_custom_call.1} parent=11 // loop_header_branch
          %57 = sbr.rel (%p55) target = $region19
        $region16: #{tpu_custom_call.1} parent=11 // loop_body
          %p59 = scmp.ge.s32.totalorder %s54, 8
          // Predicated region
          $region20: #{tpu_custom_call.1} parent=16 // pred_check
            %p60 = pneg %p59
          $region21: #{tpu_custom_call.1} parent=16 // pred_check_branch
            %62 = sbr.rel (%p60) target = $region23
          $region22: #{tpu_custom_call.1} parent=16 // pred_region
            %s63 = ssub.s32 %s54, 8
            %s64 = sand.u32 %s63, 7
            %s65 = scalar_lea.sflag [#allocation2], %s64
            %s66 = smul.u32 1, 1
            %s67 = sshll.u32 %s66, 4
            %68 = dma.done %s65, %s67
          $region23: #{tpu_custom_call.1} parent=16 // pred_fallthru
            _
          %s69 = sadd.s32 %s52, %s54
          %s70 = sld [smem:[#allocation4 + %s69]]
          %p71 = scmp.gt.s32.totalorder %s70, 0
          %s72 = scalar_select %p71, %s70, 0
          %p73 = scmp.lt.s32.totalorder %s72, 63
          %s74 = scalar_select %p73, %s72, 63
          %s75 = sand.u32 %s54, 7
          %s76 = smul.addr %s74, 16
          %s77 = scalar_lea.hbm %s1, %s76
          %s78 = scalar_lea.vmem %s51, %s54 [#allocation5]
          %s79 = scalar_lea.sflag [#allocation2], %s75
          // Predicated region
          $region24: #{tpu_custom_call.1} parent=16 // pred_check
            _
          $region25: #{tpu_custom_call.1} parent=16 // pred_check_branch
            %81 = sbr.rel target = $region27
          $region26: #{tpu_custom_call.1} parent=16 // pred_region
            %82 = sst [smem:[#allocation9]] [#allocation8]
            %83 = sst [smem:[#allocation10]] [#allocation7]
          $region27: #{tpu_custom_call.1} parent=16 // pred_fallthru
            _
          %85 = shalt.err (0)
          %s87 = sshll.u32 %s78, 4
          %s88 = int_to_ptr.vmem [resolvable:$true] %s87
          %90 = dma.hbm_to_vmem [thread:$0]  %s77, 16, %s88, %s79
        $region17: #{tpu_custom_call.1} parent=11 // loop_footer
          %s58 = sadd.s32 1, %s54
        $region18: #{tpu_custom_call.1} parent=11 // loop_footer_branch
          %53 = sbr.rel target = $region14
        $region19: #{tpu_custom_call.1} parent=11 // loop_exit
          _
        loop: start=0, step=1, limit=8
        $region28: #{tpu_custom_call.1} parent=11 // loop_pre_header
          _
        $region29: #{tpu_custom_call.1} parent=11 // loop_header
          %s92 = sphi 0, %s96
          %p93 = scmp.ge.s32.totalorder %s92, 8
        $region30: #{tpu_custom_call.1} parent=11 // loop_header_branch
          %95 = sbr.rel (%p93) target = $region34
        $region31: #{tpu_custom_call.1} parent=11 // loop_body
          %s97 = sand.u32 %s92, 7
          %s98 = scalar_lea.sflag [#allocation2], %s97
          %s99 = smul.u32 1, 1
          %s100 = sshll.u32 %s99, 4
          %101 = dma.done %s98, %s100
        $region32: #{tpu_custom_call.1} parent=11 // loop_footer
          %s96 = sadd.s32 1, %s92
        $region33: #{tpu_custom_call.1} parent=11 // loop_footer_branch
          %91 = sbr.rel target = $region29
        $region34: #{tpu_custom_call.1} parent=11 // loop_exit
          _
        %s102 = sand.u32 %s24, 1
        %s103 = scalar_lea.sflag [#allocation6], %s102
        %s104 = sand.u32 %s24, 1
        %s105 = smul.addr %s104, 8
        %s106 = scalar_lea.vmem [#allocation5], %s105
        // Predicated region
        $region35: #{tpu_custom_call.1} parent=11 // pred_check
          %p107 = pneg %p30
        $region36: #{tpu_custom_call.1} parent=11 // pred_check_branch
          %109 = sbr.rel (%p107) target = $region38
        $region37: #{tpu_custom_call.1} parent=11 // pred_region
          %s111 = ssub.s32 128, 128
          %112 = vsyncadd %s103, %s111
          %s113 = smul.addr %s15, 128
          %s114 = scalar_lea.hbm %s2, %s113
          %s116 = sshll.u32 %s106, 4
          %s117 = int_to_ptr.vmem [resolvable:$true] %s116
          %119 = dma.vmem_to_hbm [thread:$0]  %s117, 128, %s114, %s103
        $region38: #{tpu_custom_call.1} parent=11 // pred_fallthru
          _
      $region12: #{tpu_custom_call.1} parent=5 // pred_fallthru
        _
      %p120 = scmp.le.s32.totalorder 1, %s15
      // Predicated region
      $region39: #{tpu_custom_call.1} parent=5 // pred_check
        %p121 = pneg %p120
      $region40: #{tpu_custom_call.1} parent=5 // pred_check_branch
        %123 = sbr.rel (%p121) target = $region42
      $region41: #{tpu_custom_call.1} parent=5 // pred_region
        %s124 = ssub.s32 %s15, 1
        // Predicated region
        $region43: #{tpu_custom_call.1} parent=41 // pred_check
          %p125 = pneg %p36
        $region44: #{tpu_custom_call.1} parent=41 // pred_check_branch
          %127 = sbr.rel (%p125) target = $region46
        $region45: #{tpu_custom_call.1} parent=41 // pred_region
          %s128 = sand.u32 %s27, 1
          %s129 = scalar_lea.sflag [#allocation6], %s128
          %s130 = sand.u32 %s27, 1
          %s131 = smul.addr %s130, 8
          %s132 = scalar_lea.vmem [#allocation5], %s131
          %133 = dma.done %s129, 128
        $region46: #{tpu_custom_call.1} parent=41 // pred_fallthru
          _
      $region42: #{tpu_custom_call.1} parent=5 // pred_fallthru
        _
    $region6: #{tpu_custom_call.1} parent=1 // loop_footer
      %s19 = sadd.s32 1, %s15
    $region7: #{tpu_custom_call.1} parent=1 // loop_footer_branch
      %14 = sbr.rel target = $region3
    $region8: #{tpu_custom_call.1} parent=1 // loop_exit
      _
    %134 = vsyncpa [#allocation6], 1
    %s135 = scalar_lea.sflag [#allocation6], 1
    %136 = vsyncpa %s135, 1
  %137 = vsyncmov [#allocation2]
  %s138 = vpop.sfrf %137
  %p139 = scmp.eq.s32.totalorder %s138, 0
  %p140 = pneg %p139
  %142 = shalt.err (%p140)
  %s143 = scalar_lea.sflag [#allocation2], 1
  %144 = vsyncmov %s143
  %s145 = vpop.sfrf %144
  %p146 = scmp.eq.s32.totalorder %s145, 0
  %p147 = pneg %p146
  %149 = shalt.err (%p147)
  %s150 = scalar_lea.sflag [#allocation2], 2
  %151 = vsyncmov %s150
  %s152 = vpop.sfrf %151
  %p153 = scmp.eq.s32.totalorder %s152, 0
  %p154 = pneg %p153
  %156 = shalt.err (%p154)
  %s157 = scalar_lea.sflag [#allocation2], 3
  %158 = vsyncmov %s157
  %s159 = vpop.sfrf %158
  %p160 = scmp.eq.s32.totalorder %s159, 0
  %p161 = pneg %p160
  %163 = shalt.err (%p161)
  %s164 = scalar_lea.sflag [#allocation2], 4
  %165 = vsyncmov %s164
  %s166 = vpop.sfrf %165
  %p167 = scmp.eq.s32.totalorder %s166, 0
  %p168 = pneg %p167
  %170 = shalt.err (%p168)
  %s171 = scalar_lea.sflag [#allocation2], 5
  %172 = vsyncmov %s171
  %s173 = vpop.sfrf %172
  %p174 = scmp.eq.s32.totalorder %s173, 0
  %p175 = pneg %p174
  %177 = shalt.err (%p175)
  %s178 = scalar_lea.sflag [#allocation2], 6
  %179 = vsyncmov %s178
  %s180 = vpop.sfrf %179
  %p181 = scmp.eq.s32.totalorder %s180, 0
  %p182 = pneg %p181
  %184 = shalt.err (%p182)
  %s185 = scalar_lea.sflag [#allocation2], 7
  %186 = vsyncmov %s185
  %s187 = vpop.sfrf %186
  %p188 = scmp.eq.s32.totalorder %s187, 0
  %p189 = pneg %p188
  %191 = shalt.err (%p189)

</llo_original>
